<compile_context>
chip_gen: v6e
topology: v6e:2x2x1
jax: 0.10.0
libtpu: 0.0.40
codegen_flags: <defaults>
</compile_context>

<pallas_src>
import jax
import jax.numpy as jnp
from jax.experimental import pallas as pl
from jax.experimental.pallas import tpu as pltpu

_EPS = 1e-5
_PREC = jax.lax.Precision.HIGHEST  # reference only


# ----------------------------- Pallas kernels -----------------------------

def _stage1_kernel(p_ref, w1_ref, b1_ref, w2_ref, b2_ref, y_ref, x1_ref):
    """y  = relu(patches @ W1 + b1)   (conv_3x3_1 + folded BN + ReLU)
       x1 = relu(y @ W2 + b2)         (conv_1x1_1 + folded BN + ReLU, fused)"""
    y = jnp.dot(p_ref[...], w1_ref[...], preferred_element_type=jnp.float32)
    y = jnp.maximum(y + b1_ref[...], 0.0)
    x1 = jnp.dot(y.astype(w2_ref.dtype), w2_ref[...],
                 preferred_element_type=jnp.float32)
    x1 = jnp.maximum(x1 + b2_ref[...], 0.0)
    y_ref[...] = y.astype(y_ref.dtype)
    x1_ref[...] = x1.astype(x1_ref.dtype)


def _stage2_kernel(p2_ref, yg_ref, w3_ref, b3_ref, w4a_ref, w4b_ref, b4_ref,
                   o_ref):
    """x1   = relu(patches2 @ W3 + b3)          (conv_3x3_2 + BN + ReLU)
       pool = 2x2 max-pool (4 taps packed along lanes of yg)
       out  = relu(x1 @ W4a + pool @ W4b + b4)  (concat + conv_1x1_2 + BN + ReLU)"""
    x1 = jnp.dot(p2_ref[...], w3_ref[...], preferred_element_type=jnp.float32)
    x1 = jnp.maximum(x1 + b3_ref[...], 0.0)

    c = w4b_ref.shape[0]
    yg = yg_ref[...]
    pool = jnp.maximum(jnp.maximum(yg[:, 0:c], yg[:, c:2 * c]),
                       jnp.maximum(yg[:, 2 * c:3 * c], yg[:, 3 * c:4 * c]))

    acc = jnp.dot(x1.astype(w4a_ref.dtype), w4a_ref[...],
                  preferred_element_type=jnp.float32)
    acc = acc + jnp.dot(pool, w4b_ref[...], preferred_element_type=jnp.float32)
    o_ref[...] = jnp.maximum(acc + b4_ref[...], 0.0).astype(o_ref.dtype)


# --------------------------- pallas_call wrappers ---------------------------

def _pick_tile(m, candidates=(1024, 512, 256, 128, 64, 32, 16)):
    """Largest row tile (multiple of 16 sublanes) that divides m; else full m."""
    for t in candidates:
        if t <= m and m % t == 0:
            return t
    return m


def _row_spec(tm, n):
    return pl.BlockSpec((tm, n), lambda i: (i, 0))


def _const_spec(shape):
    return pl.BlockSpec(shape, lambda i: (0, 0))


def stage1(patches, w1, b1, w2, b2):
    m, kp = patches.shape
    c = w1.shape[1]
    ch = w2.shape[1]
    tm = _pick_tile(m)
    return pl.pallas_call(
        _stage1_kernel,
        grid=(m // tm,),
        in_specs=[_row_spec(tm, kp),
                  _const_spec(w1.shape), _const_spec(b1.shape),
                  _const_spec(w2.shape), _const_spec(b2.shape)],
        out_specs=[_row_spec(tm, c), _row_spec(tm, ch)],
        out_shape=(jax.ShapeDtypeStruct((m, c), jnp.bfloat16),
                   jax.ShapeDtypeStruct((m, ch), jnp.bfloat16)),
        compiler_params=pltpu.CompilerParams(
            dimension_semantics=("parallel",)),
    )(patches, w1, b1, w2, b2)


def stage2(patches2, yg, w3, b3, w4a, w4b, b4):
    m, k2 = patches2.shape
    c = w3.shape[1]
    tm = _pick_tile(m)
    return pl.pallas_call(
        _stage2_kernel,
        grid=(m // tm,),
        in_specs=[_row_spec(tm, k2), _row_spec(tm, yg.shape[1]),
                  _const_spec(w3.shape), _const_spec(b3.shape),
                  _const_spec(w4a.shape), _const_spec(w4b.shape),
                  _const_spec(b4.shape)],
        out_specs=_row_spec(tm, c),
        out_shape=jax.ShapeDtypeStruct((m, c), jnp.float32),
        compiler_params=pltpu.CompilerParams(
            dimension_semantics=("parallel",)),
    )(patches2, yg, w3, b3, w4a, w4b, b4)


# ------------------------------ glue (JAX) ---------------------------------

def _fold_bn(w2d, conv_bias, bn, eps=_EPS):
    """Fold conv bias + eval-mode BN into the weight columns and a bias:
    relu(BN(x @ w + cb)) == relu(x @ (w * s) + b)."""
    gamma, beta, mean, var = bn
    s = gamma / jnp.sqrt(var + eps)
    w_f = (w2d.astype(jnp.float32) * s[None, :]).astype(jnp.bfloat16)
    b_f = ((conv_bias - mean) * s + beta).reshape(1, -1).astype(jnp.float32)
    return w_f, b_f


def _extract_patches_3x3_s2_p1(x):
    """x: (N,H,W,C) -> (N*Ho*Wo, 9*C); 3x3 window, stride 2, padding 1.
    Tap ordering (kh, kw, c) matches a (3,3,Cin,Cout) weight reshape."""
    n, h, w, c = x.shape
    ho, wo = h // 2, w // 2
    xp = jnp.pad(x, ((0, 0), (1, 1), (1, 1), (0, 0)))
    taps = [xp[:, kh:kh + 2 * ho:2, kw:kw + 2 * wo:2, :]
            for kh in range(3) for kw in range(3)]
    return jnp.concatenate(taps, axis=-1).reshape(n * ho * wo, 9 * c)


def stem_block_forward(x_nchw, p):
    # TODO(synk): BatchNorm is eval-mode only (folded running stats);
    # PyTorch training-mode batch statistics are not reproduced.
    x = jnp.transpose(x_nchw, (0, 2, 3, 1)).astype(jnp.bfloat16)   # NHWC, bf16
    n, h, w, cin = x.shape
    ho1, wo1 = h // 2, w // 2
    ho2, wo2 = ho1 // 2, wo1 // 2
    c1 = p['w1'].shape[-1]            # 32
    half = p['w2'].shape[-1]          # 16

    # --- stage 1: conv_3x3_1 + BN + ReLU, with conv_1x1_1 + BN + ReLU fused ---
    w1, b1 = _fold_bn(p['w1'].reshape(9 * cin, c1), p['cb1'], p['bn1'])
    w2, b2 = _fold_bn(p['w2'], p['cb2'], p['bn2'])
    patches1 = _extract_patches_3x3_s2_p1(x)                       # (M1, 9*cin)
    k1 = 9 * cin
    k1p = -(-k1 // 16) * 16                                        # pad 27 -> 32
    if k1p != k1:
        patches1 = jnp.pad(patches1, ((0, 0), (0, k1p - k1)))
        w1 = jnp.pad(w1, ((0, k1p - k1), (0, 0)))
    y, x1 = stage1(patches1, w1, b1, w2, b2)     # (M1, 32) bf16, (M1, 16) bf16

    # --- stage 2: conv_3x3_2 + 2x2 maxpool + concat + conv_1x1_2 (one kernel) ---
    w3, b3 = _fold_bn(p['w3'].reshape(9 * half, c1), p['cb3'], p['bn3'])
    w4, b4 = _fold_bn(p['w4'], p['cb4'], p['bn4'])
    patches2 = _extract_patches_3x3_s2_p1(x1.reshape(n, ho1, wo1, half))
    # Pack the four 2x2 pool taps of y lane-dense into a single (M2, 4*c1)=128
    # wide input (pool reduction happens inside the kernel on the VPU).
    yg = (y.reshape(n, ho2, 2, wo2, 2, c1)
            .transpose(0, 1, 3, 2, 4, 5)
            .reshape(n * ho2 * wo2, 4 * c1))
    out = stage2(patches2, yg, w3, b3, w4[:c1], w4[c1:], b4)       # (M2, 32) f32
    out = out.reshape(n, ho2, wo2, c1)
    return jnp.transpose(out, (0, 3, 1, 2))                        # back to NCHW


# ------------------------------ parameters ----------------------------------

def init_params(key, inp_channel=3, out_channels=32):
    half = out_channels // 2
    ks = jax.random.split(key, 12)

    def conv_w(k, kh, kw, cin, cout):
        fan_in = float(cin * kh * kw)
        return jax.random.normal(k, (kh, kw, cin, cout), jnp.float32) / jnp.sqrt(fan_in)

    def bn_params(k, c):
        k1, k2, k3, k4 = jax.random.split(k, 4)
        gamma = 1.0 + 0.1 * jax.random.normal(k1, (c,), jnp.float32)
        beta = 0.1 * jax.random.normal(k2, (c,), jnp.float32)
        mean = 0.1 * jax.random.normal(k3, (c,), jnp.float32)
        var = 0.5 + jnp.abs(jax.random.normal(k4, (c,), jnp.float32))
        return (gamma, beta, mean, var)

    p = {}
    # conv_3x3_1: Conv2d(inp_channel, out_channels, 3, stride=2, padding=1) + BN
    p['w1'] = conv_w(ks[0], 3, 3, inp_channel, out_channels)
    p['cb1'] = 0.1 * jax.random.normal(ks[1], (out_channels,), jnp.float32)
    p['bn1'] = bn_params(ks[2], out_channels)
    # conv_1x1_1: Conv2d(out_channels, half, 1) + BN
    p['w2'] = conv_w(ks[3], 1, 1, out_channels, half).reshape(out_channels, half)
    p['cb2'] = 0.1 * jax.random.normal(ks[4], (half,), jnp.float32)
    p['bn2'] = bn_params(ks[5], half)
    # conv_3x3_2: Conv2d(half, out_channels, 3, stride=2, padding=1) + BN
    p['w3'] = conv_w(ks[6], 3, 3, half, out_channels)
    p['cb3'] = 0.1 * jax.random.normal(ks[7], (out_channels,), jnp.float32)
    p['bn3'] = bn_params(ks[8], out_channels)
    # conv_1x1_2: Conv2d(2*out_channels, out_channels, 1) + BN
    p['w4'] = conv_w(ks[9], 1, 1, 2 * out_channels, out_channels).reshape(
        2 * out_channels, out_channels)
    p['cb4'] = 0.1 * jax.random.normal(ks[10], (out_channels,), jnp.float32)
    p['bn4'] = bn_params(ks[11], out_channels)
    return p


# --------------------------- pure-JAX reference -----------------------------

def _ref_cna(x, w_hwio, cb, bn, stride, pad):
    gamma, beta, mean, var = bn
    y = jax.lax.conv_general_dilated(
        x, w_hwio, window_strides=(stride, stride),
        padding=[(pad, pad), (pad, pad)],
        dimension_numbers=('NHWC', 'HWIO', 'NHWC'),
        precision=_PREC)
    y = (y + cb - mean) / jnp.sqrt(var + _EPS) * gamma + beta
    return jnp.maximum(y, 0.0)


def stem_block_reference(x_nchw, p):
    x = jnp.transpose(x_nchw, (0, 2, 3, 1)).astype(jnp.float32)
    c1 = p['w1'].shape[-1]
    half = p['w2'].shape[-1]
    x = _ref_cna(x, p['w1'], p['cb1'], p['bn1'], 2, 1)
    x1 = _ref_cna(x, p['w2'].reshape(1, 1, c1, half), p['cb2'], p['bn2'], 1, 0)
    x1 = _ref_cna(x1, p['w3'], p['cb3'], p['bn3'], 2, 1)
    x2 = jax.lax.reduce_window(x, -jnp.inf, jax.lax.max,
                               window_dimensions=(1, 2, 2, 1),
                               window_strides=(1, 2, 2, 1), padding='VALID')
    xc = jnp.concatenate([x1, x2], axis=-1)
    out = _ref_cna(xc, p['w4'].reshape(1, 1, 2 * c1, c1), p['cb4'], p['bn4'], 1, 0)
    return jnp.transpose(out, (0, 3, 1, 2))


# --------------------------------- main -------------------------------------

if __name__ == "__main__":
    key = jax.random.PRNGKey(0)
    kx, kp = jax.random.split(key)
    # NCHW input, matching the PyTorch module (inp_channel=3, out_channels=32)
    x = jax.random.normal(kx, (2, 3, 16, 16), jnp.float32)
    params = init_params(kp, inp_channel=3, out_channels=32)

    fwd = jax.jit(stem_block_forward)
    out = jax.block_until_ready(fwd(x, params))

    ref = stem_block_reference(x, params)
    assert out.shape == (2, 32, 4, 4), out.shape
    assert bool(jnp.all(jnp.isfinite(out)))
    max_err = float(jnp.max(jnp.abs(out - ref)))
    # bf16-streamed activations/weights (f32 accumulation) vs f32 reference.
    assert bool(jnp.allclose(out, ref, atol=5e-2, rtol=5e-2)), max_err
    print("KERNEL_OK")
</pallas_src>

<mosaic_0001>
module attributes {stable_mosaic.version = 11 : i64} {
  func.func @_stage1_kernel(%arg0: i32, %arg1: memref<128x32xbf16, #tpu.memory_space<vmem>>, %arg2: memref<32x32xbf16, #tpu.memory_space<vmem>>, %arg3: memref<1x32xf32, #tpu.memory_space<vmem>>, %arg4: memref<32x16xbf16, #tpu.memory_space<vmem>>, %arg5: memref<1x16xf32, #tpu.memory_space<vmem>>, %arg6: memref<128x32xbf16, #tpu.memory_space<vmem>>, %arg7: memref<128x16xbf16, #tpu.memory_space<vmem>>) attributes {dimension_semantics = [#tpu.dimension_semantics<parallel>], iteration_bounds = array<i64: 1>, scalar_prefetch = 0 : i64, scratch_operands = 0 : i64, tpu.core_type = #tpu.core_type<tc>, window_params = [{transform_indices = @transform_0, window_bounds = array<i64: 128, 32>}, {pipeline_mode = #tpu.pipeline_mode<synchronous>, transform_indices = @transform_1, window_bounds = array<i64: 32, 32>}, {pipeline_mode = #tpu.pipeline_mode<synchronous>, transform_indices = @transform_2, window_bounds = array<i64: 1, 32>}, {pipeline_mode = #tpu.pipeline_mode<synchronous>, transform_indices = @transform_3, window_bounds = array<i64: 32, 16>}, {pipeline_mode = #tpu.pipeline_mode<synchronous>, transform_indices = @transform_4, window_bounds = array<i64: 1, 16>}, {transform_indices = @transform_5, window_bounds = array<i64: 128, 32>}, {transform_indices = @transform_6, window_bounds = array<i64: 128, 16>}]} {
    %c0 = arith.constant 0 : index
    %c0_0 = arith.constant 0 : index
    %0 = vector.load %arg1[%c0, %c0_0] : memref<128x32xbf16, #tpu.memory_space<vmem>>, vector<128x32xbf16>
    %c0_1 = arith.constant 0 : index
    %c0_2 = arith.constant 0 : index
    %1 = vector.load %arg2[%c0_1, %c0_2] : memref<32x32xbf16, #tpu.memory_space<vmem>>, vector<32x32xbf16>
    %cst = arith.constant dense<0.000000e+00> : vector<128x32xf32>
    %2 = tpu.matmul %0, %1, %cst {dimension_numbers = #tpu.dot_dimension_numbers<[1], [0], [0], [1], [0, 0, 1, 1], [], []>} : vector<128x32xbf16>, vector<32x32xbf16>, vector<128x32xf32> -> vector<128x32xf32>
    %c0_3 = arith.constant 0 : index
    %c0_4 = arith.constant 0 : index
    %3 = vector.load %arg3[%c0_3, %c0_4] : memref<1x32xf32, #tpu.memory_space<vmem>>, vector<1x32xf32>
    %4 = vector.broadcast %3 : vector<1x32xf32> to vector<128x32xf32>
    %5 = arith.addf %2, %4 : vector<128x32xf32>
    %cst_5 = arith.constant 0.000000e+00 : f32
    %6 = vector.broadcast %cst_5 : f32 to vector<128x32xf32>
    %7 = arith.maximumf %5, %6 : vector<128x32xf32>
    %8 = arith.truncf %7 : vector<128x32xf32> to vector<128x32xbf16>
    %c0_6 = arith.constant 0 : index
    %c0_7 = arith.constant 0 : index
    %9 = vector.load %arg4[%c0_6, %c0_7] : memref<32x16xbf16, #tpu.memory_space<vmem>>, vector<32x16xbf16>
    %cst_8 = arith.constant dense<0.000000e+00> : vector<128x16xf32>
    %10 = tpu.matmul %8, %9, %cst_8 {dimension_numbers = #tpu.dot_dimension_numbers<[1], [0], [0], [1], [0, 0, 1, 1], [], []>} : vector<128x32xbf16>, vector<32x16xbf16>, vector<128x16xf32> -> vector<128x16xf32>
    %c0_9 = arith.constant 0 : index
    %c0_10 = arith.constant 0 : index
    %11 = vector.load %arg5[%c0_9, %c0_10] : memref<1x16xf32, #tpu.memory_space<vmem>>, vector<1x16xf32>
    %12 = vector.broadcast %11 : vector<1x16xf32> to vector<128x16xf32>
    %13 = arith.addf %10, %12 : vector<128x16xf32>
    %cst_11 = arith.constant 0.000000e+00 : f32
    %14 = vector.broadcast %cst_11 : f32 to vector<128x16xf32>
    %15 = arith.maximumf %13, %14 : vector<128x16xf32>
    %16 = arith.truncf %7 : vector<128x32xf32> to vector<128x32xbf16>
    %c0_12 = arith.constant 0 : index
    %c0_13 = arith.constant 0 : index
    %17 = vector.load %arg6[%c0_12, %c0_13] : memref<128x32xbf16, #tpu.memory_space<vmem>>, vector<128x32xbf16>
    tpu.vector_store %arg6[%c0_12, %c0_13], %16 {strides = array<i32>} : memref<128x32xbf16, #tpu.memory_space<vmem>>, vector<128x32xbf16>,
    %18 = arith.truncf %15 : vector<128x16xf32> to vector<128x16xbf16>
    %c0_14 = arith.constant 0 : index
    %c0_15 = arith.constant 0 : index
    %19 = vector.load %arg7[%c0_14, %c0_15] : memref<128x16xbf16, #tpu.memory_space<vmem>>, vector<128x16xbf16>
    tpu.vector_store %arg7[%c0_14, %c0_15], %18 {strides = array<i32>} : memref<128x16xbf16, #tpu.memory_space<vmem>>, vector<128x16xbf16>,
    return
  }
  func.func @transform_0(%arg0: i32) -> (i32, i32) {
    %c0_i32 = arith.constant 0 : i32
    %c0_i32_0 = arith.constant 0 : i32
    return %arg0, %c0_i32 : i32, i32
  }
  func.func @transform_1(%arg0: i32) -> (i32, i32) {
    %c0_i32 = arith.constant 0 : i32
    %c0_i32_0 = arith.constant 0 : i32
    %c0_i32_1 = arith.constant 0 : i32
    return %c0_i32, %c0_i32_0 : i32, i32
  }
  func.func @transform_2(%arg0: i32) -> (i32, i32) {
    %c0_i32 = arith.constant 0 : i32
    %c0_i32_0 = arith.constant 0 : i32
    %c0_i32_1 = arith.constant 0 : i32
    return %c0_i32, %c0_i32_0 : i32, i32
  }
  func.func @transform_3(%arg0: i32) -> (i32, i32) {
    %c0_i32 = arith.constant 0 : i32
    %c0_i32_0 = arith.constant 0 : i32
    %c0_i32_1 = arith.constant 0 : i32
    return %c0_i32, %c0_i32_0 : i32, i32
  }
  func.func @transform_4(%arg0: i32) -> (i32, i32) {
    %c0_i32 = arith.constant 0 : i32
    %c0_i32_0 = arith.constant 0 : i32
    %c0_i32_1 = arith.constant 0 : i32
    return %c0_i32, %c0_i32_0 : i32, i32
  }
  func.func @transform_5(%arg0: i32) -> (i32, i32) {
    %c0_i32 = arith.constant 0 : i32
    %c0_i32_0 = arith.constant 0 : i32
    return %arg0, %c0_i32 : i32, i32
  }
  func.func @transform_6(%arg0: i32) -> (i32, i32) {
    %c0_i32 = arith.constant 0 : i32
    %c0_i32_0 = arith.constant 0 : i32
    return %arg0, %c0_i32 : i32, i32
  }
}

module attributes {stable_mosaic.version = 11 : i64} {
  func.func @_stage2_kernel(%arg0: i32, %arg1: memref<32x144xbf16, #tpu.memory_space<vmem>>, %arg2: memref<32x128xbf16, #tpu.memory_space<vmem>>, %arg3: memref<144x32xbf16, #tpu.memory_space<vmem>>, %arg4: memref<1x32xf32, #tpu.memory_space<vmem>>, %arg5: memref<32x32xbf16, #tpu.memory_space<vmem>>, %arg6: memref<32x32xbf16, #tpu.memory_space<vmem>>, %arg7: memref<1x32xf32, #tpu.memory_space<vmem>>, %arg8: memref<32x32xf32, #tpu.memory_space<vmem>>) attributes {dimension_semantics = [#tpu.dimension_semantics<parallel>], iteration_bounds = array<i64: 1>, scalar_prefetch = 0 : i64, scratch_operands = 0 : i64, tpu.core_type = #tpu.core_type<tc>, window_params = [{transform_indices = @transform_0, window_bounds = array<i64: 32, 144>}, {transform_indices = @transform_1, window_bounds = array<i64: 32, 128>}, {pipeline_mode = #tpu.pipeline_mode<synchronous>, transform_indices = @transform_2, window_bounds = array<i64: 144, 32>}, {pipeline_mode = #tpu.pipeline_mode<synchronous>, transform_indices = @transform_3, window_bounds = array<i64: 1, 32>}, {pipeline_mode = #tpu.pipeline_mode<synchronous>, transform_indices = @transform_4, window_bounds = array<i64: 32, 32>}, {pipeline_mode = #tpu.pipeline_mode<synchronous>, transform_indices = @transform_5, window_bounds = array<i64: 32, 32>}, {pipeline_mode = #tpu.pipeline_mode<synchronous>, transform_indices = @transform_6, window_bounds = array<i64: 1, 32>}, {transform_indices = @transform_7, window_bounds = array<i64: 32, 32>}]} {
    %c0 = arith.constant 0 : index
    %c0_0 = arith.constant 0 : index
    %0 = vector.load %arg1[%c0, %c0_0] : memref<32x144xbf16, #tpu.memory_space<vmem>>, vector<32x144xbf16>
    %c0_1 = arith.constant 0 : index
    %c0_2 = arith.constant 0 : index
    %1 = vector.load %arg3[%c0_1, %c0_2] : memref<144x32xbf16, #tpu.memory_space<vmem>>, vector<144x32xbf16>
    %cst = arith.constant dense<0.000000e+00> : vector<32x32xf32>
    %2 = tpu.matmul %0, %1, %cst {dimension_numbers = #tpu.dot_dimension_numbers<[1], [0], [0], [1], [0, 0, 1, 1], [], []>} : vector<32x144xbf16>, vector<144x32xbf16>, vector<32x32xf32> -> vector<32x32xf32>
    %c0_3 = arith.constant 0 : index
    %c0_4 = arith.constant 0 : index
    %3 = vector.load %arg4[%c0_3, %c0_4] : memref<1x32xf32, #tpu.memory_space<vmem>>, vector<1x32xf32>
    %4 = vector.broadcast %3 : vector<1x32xf32> to vector<32x32xf32>
    %5 = arith.addf %2, %4 : vector<32x32xf32>
    %cst_5 = arith.constant 0.000000e+00 : f32
    %6 = vector.broadcast %cst_5 : f32 to vector<32x32xf32>
    %7 = arith.maximumf %5, %6 : vector<32x32xf32>
    %c0_6 = arith.constant 0 : index
    %c0_7 = arith.constant 0 : index
    %8 = vector.load %arg2[%c0_6, %c0_7] : memref<32x128xbf16, #tpu.memory_space<vmem>>, vector<32x128xbf16>
    %9 = vector.extract_strided_slice %8 {offsets = [0, 0], sizes = [32, 32], strides = [1, 1]} : vector<32x128xbf16> to vector<32x32xbf16>
    %10 = vector.extract_strided_slice %8 {offsets = [0, 32], sizes = [32, 32], strides = [1, 1]} : vector<32x128xbf16> to vector<32x32xbf16>
    %11 = arith.maximumf %9, %10 : vector<32x32xbf16>
    %12 = vector.extract_strided_slice %8 {offsets = [0, 64], sizes = [32, 32], strides = [1, 1]} : vector<32x128xbf16> to vector<32x32xbf16>
    %13 = vector.extract_strided_slice %8 {offsets = [0, 96], sizes = [32, 32], strides = [1, 1]} : vector<32x128xbf16> to vector<32x32xbf16>
    %14 = arith.maximumf %12, %13 : vector<32x32xbf16>
    %15 = arith.maximumf %11, %14 : vector<32x32xbf16>
    %16 = arith.truncf %7 : vector<32x32xf32> to vector<32x32xbf16>
    %c0_8 = arith.constant 0 : index
    %c0_9 = arith.constant 0 : index
    %17 = vector.load %arg5[%c0_8, %c0_9] : memref<32x32xbf16, #tpu.memory_space<vmem>>, vector<32x32xbf16>
    %cst_10 = arith.constant dense<0.000000e+00> : vector<32x32xf32>
    %18 = tpu.matmul %16, %17, %cst_10 {dimension_numbers = #tpu.dot_dimension_numbers<[1], [0], [0], [1], [0, 0, 1, 1], [], []>} : vector<32x32xbf16>, vector<32x32xbf16>, vector<32x32xf32> -> vector<32x32xf32>
    %c0_11 = arith.constant 0 : index
    %c0_12 = arith.constant 0 : index
    %19 = vector.load %arg6[%c0_11, %c0_12] : memref<32x32xbf16, #tpu.memory_space<vmem>>, vector<32x32xbf16>
    %cst_13 = arith.constant dense<0.000000e+00> : vector<32x32xf32>
    %20 = tpu.matmul %15, %19, %cst_13 {dimension_numbers = #tpu.dot_dimension_numbers<[1], [0], [0], [1], [0, 0, 1, 1], [], []>} : vector<32x32xbf16>, vector<32x32xbf16>, vector<32x32xf32> -> vector<32x32xf32>
    %21 = arith.addf %18, %20 : vector<32x32xf32>
    %c0_14 = arith.constant 0 : index
    %c0_15 = arith.constant 0 : index
    %22 = vector.load %arg7[%c0_14, %c0_15] : memref<1x32xf32, #tpu.memory_space<vmem>>, vector<1x32xf32>
    %23 = vector.broadcast %22 : vector<1x32xf32> to vector<32x32xf32>
    %24 = arith.addf %21, %23 : vector<32x32xf32>
    %cst_16 = arith.constant 0.000000e+00 : f32
    %25 = vector.broadcast %cst_16 : f32 to vector<32x32xf32>
    %26 = arith.maximumf %24, %25 : vector<32x32xf32>
    %c0_17 = arith.constant 0 : index
    %c0_18 = arith.constant 0 : index
    %27 = vector.load %arg8[%c0_17, %c0_18] : memref<32x32xf32, #tpu.memory_space<vmem>>, vector<32x32xf32>
    tpu.vector_store %arg8[%c0_17, %c0_18], %26 {strides = array<i32>} : memref<32x32xf32, #tpu.memory_space<vmem>>, vector<32x32xf32>,
    return
  }
  func.func @transform_0(%arg0: i32) -> (i32, i32) {
    %c0_i32 = arith.constant 0 : i32
    %c0_i32_0 = arith.constant 0 : i32
    return %arg0, %c0_i32 : i32, i32
  }
  func.func @transform_1(%arg0: i32) -> (i32, i32) {
    %c0_i32 = arith.constant 0 : i32
    %c0_i32_0 = arith.constant 0 : i32
    return %arg0, %c0_i32 : i32, i32
  }
  func.func @transform_2(%arg0: i32) -> (i32, i32) {
    %c0_i32 = arith.constant 0 : i32
    %c0_i32_0 = arith.constant 0 : i32
    %c0_i32_1 = arith.constant 0 : i32
    return %c0_i32, %c0_i32_0 : i32, i32
  }
  func.func @transform_3(%arg0: i32) -> (i32, i32) {
    %c0_i32 = arith.constant 0 : i32
    %c0_i32_0 = arith.constant 0 : i32
    %c0_i32_1 = arith.constant 0 : i32
    return %c0_i32, %c0_i32_0 : i32, i32
  }
  func.func @transform_4(%arg0: i32) -> (i32, i32) {
    %c0_i32 = arith.constant 0 : i32
    %c0_i32_0 = arith.constant 0 : i32
    %c0_i32_1 = arith.constant 0 : i32
    return %c0_i32, %c0_i32_0 : i32, i32
  }
  func.func @transform_5(%arg0: i32) -> (i32, i32) {
    %c0_i32 = arith.constant 0 : i32
    %c0_i32_0 = arith.constant 0 : i32
    %c0_i32_1 = arith.constant 0 : i32
    return %c0_i32, %c0_i32_0 : i32, i32
  }
  func.func @transform_6(%arg0: i32) -> (i32, i32) {
    %c0_i32 = arith.constant 0 : i32
    %c0_i32_0 = arith.constant 0 : i32
    %c0_i32_1 = arith.constant 0 : i32
    return %c0_i32, %c0_i32_0 : i32, i32
  }
  func.func @transform_7(%arg0: i32) -> (i32, i32) {
    %c0_i32 = arith.constant 0 : i32
    %c0_i32_0 = arith.constant 0 : i32
    return %arg0, %c0_i32 : i32, i32
  }
}

</mosaic_0001>

<llo_original>
// kernel: stem_block_forward.2
$region0: #{stem_block_forward.2}
  #allocation0 [shape = 'u32[]', space=smem, size = 0x4, offset = 0x4, fixed_abs, tag = 'smem constant byte address 0x4 - core index']
  #allocation1 [shape = 'u32[144,128]{1,0:T(1,128)}', space=vmem, size = 0x12000, scoped, tag = 'internal scratch']
  %s0 = inlined_call_operand.vmem [shape: bf16[128,32], index: 0, kind: input, shape index: {}]
  %s1 = inlined_call_operand.vmem [shape: bf16[32,32], index: 1, kind: input, shape index: {}]
  %s2 = inlined_call_operand.vmem [shape: f32[1,32], index: 2, kind: input, shape index: {}]
  %s3 = inlined_call_operand.vmem [shape: bf16[32,16], index: 3, kind: input, shape index: {}]
  %s4 = inlined_call_operand.vmem [shape: f32[1,16], index: 4, kind: input, shape index: {}]
  %s5 = inlined_call_operand.vmem [shape: bf16[128,32], index: 5, kind: output, shape index: {0}]
  %s6 = inlined_call_operand.vmem [shape: bf16[128,16], index: 6, kind: output, shape index: {1}]
  %7 = xla_tuple %s5, %s6
  %s8 = sld [smem:[#allocation0]]
  $region38: #{stem_block_forward.2} parent=0
    _
  %s10 = ssub.s32 1, %s8
  %s11 = scalar_select 0, %s10, %s8
  // Predicated region
  $region2: #{stem_block_forward.2} parent=0 // pred_check
    _
  $region3: #{stem_block_forward.2} parent=0 // pred_check_branch
    %13 = sbr.rel (0) target = $region5
  $region4: #{stem_block_forward.2} parent=0 // pred_region
    _
  $region5: #{stem_block_forward.2} parent=0 // pred_fallthru
    _
  // Predicated region
  $region6: #{stem_block_forward.2} parent=0 // pred_check
    _
  $region7: #{stem_block_forward.2} parent=0 // pred_check_branch
    %15 = sbr.rel (0) target = $region9
  $region8: #{stem_block_forward.2} parent=0 // pred_region
    _
  $region9: #{stem_block_forward.2} parent=0 // pred_fallthru
    _
  // Predicated region
  $region10: #{stem_block_forward.2} parent=0 // pred_check
    _
  $region11: #{stem_block_forward.2} parent=0 // pred_check_branch
    %17 = sbr.rel (0) target = $region13
  $region12: #{stem_block_forward.2} parent=0 // pred_region
    _
  $region13: #{stem_block_forward.2} parent=0 // pred_fallthru
    _
  // Predicated region
  $region14: #{stem_block_forward.2} parent=0 // pred_check
    _
  $region15: #{stem_block_forward.2} parent=0 // pred_check_branch
    %19 = sbr.rel (0) target = $region17
  $region16: #{stem_block_forward.2} parent=0 // pred_region
    _
  $region17: #{stem_block_forward.2} parent=0 // pred_fallthru
    _
  // Predicated region
  $region18: #{stem_block_forward.2} parent=0 // pred_check
    _
  $region19: #{stem_block_forward.2} parent=0 // pred_check_branch
    %21 = sbr.rel (0) target = $region21
  $region20: #{stem_block_forward.2} parent=0 // pred_region
    _
  $region21: #{stem_block_forward.2} parent=0 // pred_fallthru
    _
  %v23 = vld [vmem:[%s0] sm:$0xf]
  %v24 = vld [vmem:[%s0 + $0x4] sm:$0xf]
  %v25 = vld [vmem:[%s0 + $0x8] sm:$0xf]
  %v26 = vld [vmem:[%s0 + $0xc] sm:$0xf]
  %v27 = vld [vmem:[%s0 + $0x10] sm:$0xf]
  %v28 = vld [vmem:[%s0 + $0x14] sm:$0xf]
  %v29 = vld [vmem:[%s0 + $0x18] sm:$0xf]
  %v30 = vld [vmem:[%s0 + $0x1c] sm:$0xf]
  %v31 = vld [vmem:[%s0 + $0x20] sm:$0xf]
  %v32 = vld [vmem:[%s0 + $0x24] sm:$0xf]
  %v33 = vld [vmem:[%s0 + $0x28] sm:$0xf]
  %v34 = vld [vmem:[%s0 + $0x2c] sm:$0xf]
  %v35 = vld [vmem:[%s0 + $0x30] sm:$0xf]
  %v36 = vld [vmem:[%s0 + $0x34] sm:$0xf]
  %v37 = vld [vmem:[%s0 + $0x38] sm:$0xf]
  %v38 = vld [vmem:[%s0 + $0x3c] sm:$0xf]
  %v39 = vld [vmem:[%s1] sm:$0xf]
  %v40 = vld [vmem:[%s1 + $0x4] sm:$0xf]
  %v41 = vld [vmem:[%s1 + $0x8] sm:$0xf]
  %v42 = vld [vmem:[%s1 + $0xc] sm:$0xf]
  %v43 = vld [vmem:[%s2] sm:$0x1]
  %v45 = vlaneseq
  %v46 = vshrl.u32 %v45, 7
  %v47 = vsub.s32 0, %v46
  %v48 = vrot.slane %v43, %v47
  %v66 = vunpack.c.l.b16 %v23
  %v67 = vunpack.c.l.b16 %v24
  %v68 = vunpack.c.l.b16 %v25
  %v69 = vunpack.c.l.b16 %v26
  %v70 = vunpack.c.l.b16 %v27
  %v71 = vunpack.c.l.b16 %v28
  %v72 = vunpack.c.l.b16 %v29
  %v73 = vunpack.c.l.b16 %v30
  %v74 = vunpack.c.l.b16 %v31
  %v75 = vunpack.c.l.b16 %v32
  %v76 = vunpack.c.l.b16 %v33
  %v77 = vunpack.c.l.b16 %v34
  %v78 = vunpack.c.l.b16 %v35
  %v79 = vunpack.c.l.b16 %v36
  %v80 = vunpack.c.l.b16 %v37
  %v81 = vunpack.c.l.b16 %v38
  %v82 = vpack.c.b16 %v67, %v66
  %v83 = vpack.c.b16 %v69, %v68
  %v84 = vpack.c.b16 %v71, %v70
  %v85 = vpack.c.b16 %v73, %v72
  %v86 = vpack.c.b16 %v75, %v74
  %v87 = vpack.c.b16 %v77, %v76
  %v88 = vpack.c.b16 %v79, %v78
  %v89 = vpack.c.b16 %v81, %v80
  %v94 = vunpack.c.l.b16 %v39
  %v95 = vunpack.c.l.b16 %v40
  %v96 = vunpack.c.l.b16 %v41
  %v97 = vunpack.c.l.b16 %v42
  %v98 = vpack.c.b16 %v95, %v94
  %v99 = vpack.c.b16 %v97, %v96
  %vm102 = vcmask 261120
  %v104 = vsel %vm102, %v82, 0
  %v107 = vsel %vm102, %v83, 0
  %v110 = vsel %vm102, %v84, 0
  %v113 = vsel %vm102, %v85, 0
  %v116 = vsel %vm102, %v86, 0
  %v119 = vsel %vm102, %v87, 0
  %v122 = vsel %vm102, %v88, 0
  %v125 = vsel %vm102, %v89, 0
  %127 = vmatprep.subr.bf16.mxu0 0
  %128 = vmatpush1.bf16.msra.mxu0 0
  %129 = vmatprep.subr.bf16.mxu0 0
  %130 = vmatpush1.bf16.msra.mxu0 0
  %131 = vmatprep.subr.bf16.mxu0 0
  %132 = vmatpush1.bf16.msra.mxu0 0
  %133 = vmatprep.subr.bf16.mxu0 0
  %134 = vmatpush1.bf16.msra.mxu0 0
  %135 = vmatprep.subr.bf16.mxu0 0
  %136 = vmatpush1.bf16.msra.mxu0 0
  %137 = vmatprep.subr.bf16.mxu0 0
  %138 = vmatpush1.bf16.msra.mxu0 0
  %139 = vmatprep.subr.bf16.mxu0 0
  %140 = vmatpush1.bf16.msra.mxu0 %v99
  %141 = vmatprep.subr.bf16.mxu0 0
  %142 = vmatpush1.bf16.msra.mxu0 %v98
  %143 = vmatprep.subr.bf16.mxu0 0
  %144 = vmatpush2.bf16.msra.mxu0 0
  %145 = vmatprep.subr.bf16.mxu0 0
  %146 = vmatpush2.bf16.msra.mxu0 0
  %147 = vmatprep.subr.bf16.mxu0 0
  %148 = vmatpush2.bf16.msra.mxu0 0
  %149 = vmatprep.subr.bf16.mxu0 0
  %150 = vmatpush2.bf16.msra.mxu0 0
  %151 = vmatprep.subr.bf16.mxu0 0
  %152 = vmatpush2.bf16.msra.mxu0 0
  %153 = vmatprep.subr.bf16.mxu0 0
  %154 = vmatpush2.bf16.msra.mxu0 0
  %155 = vmatprep.subr.bf16.mxu0 0
  %156 = vmatpush2.bf16.msra.mxu0 0
  %157 = vmatprep.subr.bf16.mxu0 0
  %158 = vmatpush2.bf16.msra.mxu0 0
  %159 = vmatprep.mubr.bf16.mxu0 0
  %160 = vmatmul.mubr.bf16.gmra.mxu0 %v104
  %v161 = vpop.f32.mrf.mxu0
  %v162 = vadd.f32 %v48, %v161
  %v163 = vpop.f32.mrf.mxu0
  %v164 = vpop.f32.mrf.mxu0
  %v165 = vadd.f32 %v48, %v164
  %v166 = vpop.f32.mrf.mxu0
  %167 = vmatprep.mubr.bf16.mxu0 0
  %168 = vmatmul.mubr.bf16.gmra.mxu0 %v107
  %v169 = vpop.f32.mrf.mxu0
  %v170 = vadd.f32 %v48, %v169
  %v171 = vpop.f32.mrf.mxu0
  %v172 = vpop.f32.mrf.mxu0
  %v173 = vadd.f32 %v48, %v172
  %v174 = vpop.f32.mrf.mxu0
  %175 = vmatprep.mubr.bf16.mxu0 0
  %176 = vmatmul.mubr.bf16.gmra.mxu0 %v110
  %v177 = vpop.f32.mrf.mxu0
  %v178 = vadd.f32 %v48, %v177
  %v179 = vpop.f32.mrf.mxu0
  %v180 = vpop.f32.mrf.mxu0
  %v181 = vadd.f32 %v48, %v180
  %v182 = vpop.f32.mrf.mxu0
  %183 = vmatprep.mubr.bf16.mxu0 0
  %184 = vmatmul.mubr.bf16.gmra.mxu0 %v113
  %v185 = vpop.f32.mrf.mxu0
  %v186 = vadd.f32 %v48, %v185
  %v187 = vpop.f32.mrf.mxu0
  %v188 = vpop.f32.mrf.mxu0
  %v189 = vadd.f32 %v48, %v188
  %v190 = vpop.f32.mrf.mxu0
  %191 = vmatprep.mubr.bf16.mxu0 0
  %192 = vmatmul.mubr.bf16.gmra.mxu0 %v116
  %v193 = vpop.f32.mrf.mxu0
  %v194 = vadd.f32 %v48, %v193
  %v195 = vpop.f32.mrf.mxu0
  %v196 = vpop.f32.mrf.mxu0
  %v197 = vadd.f32 %v48, %v196
  %v198 = vpop.f32.mrf.mxu0
  %199 = vmatprep.mubr.bf16.mxu0 0
  %200 = vmatmul.mubr.bf16.gmra.mxu0 %v119
  %v201 = vpop.f32.mrf.mxu0
  %v202 = vadd.f32 %v48, %v201
  %v203 = vpop.f32.mrf.mxu0
  %v204 = vpop.f32.mrf.mxu0
  %v205 = vadd.f32 %v48, %v204
  %v206 = vpop.f32.mrf.mxu0
  %207 = vmatprep.mubr.bf16.mxu0 0
  %208 = vmatmul.mubr.bf16.gmra.mxu0 %v122
  %v209 = vpop.f32.mrf.mxu0
  %v210 = vadd.f32 %v48, %v209
  %v211 = vpop.f32.mrf.mxu0
  %v212 = vpop.f32.mrf.mxu0
  %v213 = vadd.f32 %v48, %v212
  %v214 = vpop.f32.mrf.mxu0
  %215 = vmatprep.mubr.bf16.mxu0 0
  %216 = vmatmul.mubr.bf16.gmra.mxu0 %v125
  %v217 = vpop.f32.mrf.mxu0
  %v218 = vadd.f32 %v48, %v217
  %v219 = vpop.f32.mrf.mxu0
  %v220 = vpop.f32.mrf.mxu0
  %v221 = vadd.f32 %v48, %v220
  %v222 = vpop.f32.mrf.mxu0
  %223 = vdwg.mxu0
  %v224 = vmax.f32 %v162, 0.0
  %v225 = vmax.f32 %v165, 0.0
  %v226 = vmax.f32 %v170, 0.0
  %v227 = vmax.f32 %v173, 0.0
  %v228 = vmax.f32 %v178, 0.0
  %v229 = vmax.f32 %v181, 0.0
  %v230 = vmax.f32 %v186, 0.0
  %v231 = vmax.f32 %v189, 0.0
  %v232 = vmax.f32 %v194, 0.0
  %v233 = vmax.f32 %v197, 0.0
  %v234 = vmax.f32 %v202, 0.0
  %v235 = vmax.f32 %v205, 0.0
  %v236 = vmax.f32 %v210, 0.0
  %v237 = vmax.f32 %v213, 0.0
  %v238 = vmax.f32 %v218, 0.0
  %v239 = vmax.f32 %v221, 0.0
  %v240 = vpack.c.bf16 %v225, %v224
  %v241 = vpack.c.bf16 %v227, %v226
  %v242 = vpack.c.bf16 %v229, %v228
  %v243 = vpack.c.bf16 %v231, %v230
  %v244 = vpack.c.bf16 %v233, %v232
  %v245 = vpack.c.bf16 %v235, %v234
  %v246 = vpack.c.bf16 %v237, %v236
  %v247 = vpack.c.bf16 %v239, %v238
  %v248 = vld [vmem:[%s3] sm:$0xf]
  %v249 = vld [vmem:[%s3 + $0x4] sm:$0xf]
  %v250 = vld [vmem:[%s3 + $0x8] sm:$0xf]
  %v251 = vld [vmem:[%s3 + $0xc] sm:$0xf]
  %v252 = vld [vmem:[%s4] sm:$0x1]
  %v254 = vlaneseq
  %v255 = vshrl.u32 %v254, 7
  %v256 = vsub.s32 0, %v255
  %v257 = vrot.slane %v252, %v256
  %v263 = vunpack.c.l.b16 %v248
  %v264 = vunpack.c.l.b16 %v249
  %v265 = vunpack.c.l.b16 %v250
  %v266 = vunpack.c.l.b16 %v251
  %v267 = vpack.c.b16 %v264, %v263
  %v268 = vpack.c.b16 %v266, %v265
  %v272 = vsel %vm102, %v240, 0
  %v275 = vsel %vm102, %v241, 0
  %v278 = vsel %vm102, %v242, 0
  %v281 = vsel %vm102, %v243, 0
  %v284 = vsel %vm102, %v244, 0
  %v287 = vsel %vm102, %v245, 0
  %v290 = vsel %vm102, %v246, 0
  %v293 = vsel %vm102, %v247, 0
  %295 = vmatprep.subr.bf16.mxu0 0
  %296 = vmatpush1.bf16.msra.mxu0 0
  %297 = vmatprep.subr.bf16.mxu0 0
  %298 = vmatpush1.bf16.msra.mxu0 0
  %299 = vmatprep.subr.bf16.mxu0 0
  %300 = vmatpush1.bf16.msra.mxu0 0
  %301 = vmatprep.subr.bf16.mxu0 0
  %302 = vmatpush1.bf16.msra.mxu0 0
  %303 = vmatprep.subr.bf16.mxu0 0
  %304 = vmatpush1.bf16.msra.mxu0 0
  %305 = vmatprep.subr.bf16.mxu0 0
  %306 = vmatpush1.bf16.msra.mxu0 0
  %307 = vmatprep.subr.bf16.mxu0 0
  %308 = vmatpush1.bf16.msra.mxu0 %v268
  %309 = vmatprep.subr.bf16.mxu0 0
  %310 = vmatpush1.bf16.msra.mxu0 %v267
  %311 = vmatprep.subr.bf16.mxu0 0
  %312 = vmatpush2.bf16.msra.mxu0 0
  %313 = vmatprep.subr.bf16.mxu0 0
  %314 = vmatpush2.bf16.msra.mxu0 0
  %315 = vmatprep.subr.bf16.mxu0 0
  %316 = vmatpush2.bf16.msra.mxu0 0
  %317 = vmatprep.subr.bf16.mxu0 0
  %318 = vmatpush2.bf16.msra.mxu0 0
  %319 = vmatprep.subr.bf16.mxu0 0
  %320 = vmatpush2.bf16.msra.mxu0 0
  %321 = vmatprep.subr.bf16.mxu0 0
  %322 = vmatpush2.bf16.msra.mxu0 0
  %323 = vmatprep.subr.bf16.mxu0 0
  %324 = vmatpush2.bf16.msra.mxu0 0
  %325 = vmatprep.subr.bf16.mxu0 0
  %326 = vmatpush2.bf16.msra.mxu0 0
  %327 = vmatprep.mubr.bf16.mxu0 0
  %328 = vmatmul.mubr.bf16.gmra.mxu0 %v272
  %v329 = vpop.f32.mrf.mxu0
  %v330 = vadd.f32 %v257, %v329
  %v331 = vpop.f32.mrf.mxu0
  %v332 = vpop.f32.mrf.mxu0
  %v333 = vadd.f32 %v257, %v332
  %v334 = vpop.f32.mrf.mxu0
  %335 = vmatprep.mubr.bf16.mxu0 0
  %336 = vmatmul.mubr.bf16.gmra.mxu0 %v275
  %v337 = vpop.f32.mrf.mxu0
  %v338 = vadd.f32 %v257, %v337
  %v339 = vpop.f32.mrf.mxu0
  %v340 = vpop.f32.mrf.mxu0
  %v341 = vadd.f32 %v257, %v340
  %v342 = vpop.f32.mrf.mxu0
  %343 = vmatprep.mubr.bf16.mxu0 0
  %344 = vmatmul.mubr.bf16.gmra.mxu0 %v278
  %v345 = vpop.f32.mrf.mxu0
  %v346 = vadd.f32 %v257, %v345
  %v347 = vpop.f32.mrf.mxu0
  %v348 = vpop.f32.mrf.mxu0
  %v349 = vadd.f32 %v257, %v348
  %v350 = vpop.f32.mrf.mxu0
  %351 = vmatprep.mubr.bf16.mxu0 0
  %352 = vmatmul.mubr.bf16.gmra.mxu0 %v281
  %v353 = vpop.f32.mrf.mxu0
  %v354 = vadd.f32 %v257, %v353
  %v355 = vpop.f32.mrf.mxu0
  %v356 = vpop.f32.mrf.mxu0
  %v357 = vadd.f32 %v257, %v356
  %v358 = vpop.f32.mrf.mxu0
  %359 = vmatprep.mubr.bf16.mxu0 0
  %360 = vmatmul.mubr.bf16.gmra.mxu0 %v284
  %v361 = vpop.f32.mrf.mxu0
  %v362 = vadd.f32 %v257, %v361
  %v363 = vpop.f32.mrf.mxu0
  %v364 = vpop.f32.mrf.mxu0
  %v365 = vadd.f32 %v257, %v364
  %v366 = vpop.f32.mrf.mxu0
  %367 = vmatprep.mubr.bf16.mxu0 0
  %368 = vmatmul.mubr.bf16.gmra.mxu0 %v287
  %v369 = vpop.f32.mrf.mxu0
  %v370 = vadd.f32 %v257, %v369
  %v371 = vpop.f32.mrf.mxu0
  %v372 = vpop.f32.mrf.mxu0
  %v373 = vadd.f32 %v257, %v372
  %v374 = vpop.f32.mrf.mxu0
  %375 = vmatprep.mubr.bf16.mxu0 0
  %376 = vmatmul.mubr.bf16.gmra.mxu0 %v290
  %v377 = vpop.f32.mrf.mxu0
  %v378 = vadd.f32 %v257, %v377
  %v379 = vpop.f32.mrf.mxu0
  %v380 = vpop.f32.mrf.mxu0
  %v381 = vadd.f32 %v257, %v380
  %v382 = vpop.f32.mrf.mxu0
  %383 = vmatprep.mubr.bf16.mxu0 0
  %384 = vmatmul.mubr.bf16.gmra.mxu0 %v293
  %v385 = vpop.f32.mrf.mxu0
  %v386 = vadd.f32 %v257, %v385
  %v387 = vpop.f32.mrf.mxu0
  %v388 = vpop.f32.mrf.mxu0
  %v389 = vadd.f32 %v257, %v388
  %v390 = vpop.f32.mrf.mxu0
  %391 = vdwg.mxu0
  %v392 = vmax.f32 %v330, 0.0
  %v393 = vmax.f32 %v333, 0.0
  %v394 = vmax.f32 %v338, 0.0
  %v395 = vmax.f32 %v341, 0.0
  %v396 = vmax.f32 %v346, 0.0
  %v397 = vmax.f32 %v349, 0.0
  %v398 = vmax.f32 %v354, 0.0
  %v399 = vmax.f32 %v357, 0.0
  %v400 = vmax.f32 %v362, 0.0
  %v401 = vmax.f32 %v365, 0.0
  %v402 = vmax.f32 %v370, 0.0
  %v403 = vmax.f32 %v373, 0.0
  %v404 = vmax.f32 %v378, 0.0
  %v405 = vmax.f32 %v381, 0.0
  %v406 = vmax.f32 %v386, 0.0
  %v407 = vmax.f32 %v389, 0.0
  %v416 = vunpack.c.l.b16 %v240
  %v417 = vunpack.c.h.b16 %v240
  %v418 = vunpack.c.l.b16 %v241
  %v419 = vunpack.c.h.b16 %v241
  %v420 = vunpack.c.l.b16 %v242
  %v421 = vunpack.c.h.b16 %v242
  %v422 = vunpack.c.l.b16 %v243
  %v423 = vunpack.c.h.b16 %v243
  %v424 = vunpack.c.l.b16 %v244
  %v425 = vunpack.c.h.b16 %v244
  %v426 = vunpack.c.l.b16 %v245
  %v427 = vunpack.c.h.b16 %v245
  %v428 = vunpack.c.l.b16 %v246
  %v429 = vunpack.c.h.b16 %v246
  %v430 = vunpack.c.l.b16 %v247
  %v431 = vunpack.c.h.b16 %v247
  %v432 = vpack.c.b16 %v416, %v416
  %v433 = vpack.c.b16 %v417, %v417
  %v434 = vpack.c.b16 %v418, %v418
  %v435 = vpack.c.b16 %v419, %v419
  %v436 = vpack.c.b16 %v420, %v420
  %v437 = vpack.c.b16 %v421, %v421
  %v438 = vpack.c.b16 %v422, %v422
  %v439 = vpack.c.b16 %v423, %v423
  %v440 = vpack.c.b16 %v424, %v424
  %v441 = vpack.c.b16 %v425, %v425
  %v442 = vpack.c.b16 %v426, %v426
  %v443 = vpack.c.b16 %v427, %v427
  %v444 = vpack.c.b16 %v428, %v428
  %v445 = vpack.c.b16 %v429, %v429
  %v446 = vpack.c.b16 %v430, %v430
  %v447 = vpack.c.b16 %v431, %v431
  %vm464 = vcmask 257024
  %465 = vst.msk [vmem:[%s5] sm:$0xf] %vm464, %v432
  %466 = vst.msk [vmem:[%s5 + $0x4] sm:$0xf] %vm464, %v433
  %467 = vst.msk [vmem:[%s5 + $0x8] sm:$0xf] %vm464, %v434
  %468 = vst.msk [vmem:[%s5 + $0xc] sm:$0xf] %vm464, %v435
  %469 = vst.msk [vmem:[%s5 + $0x10] sm:$0xf] %vm464, %v436
  %470 = vst.msk [vmem:[%s5 + $0x14] sm:$0xf] %vm464, %v437
  %471 = vst.msk [vmem:[%s5 + $0x18] sm:$0xf] %vm464, %v438
  %472 = vst.msk [vmem:[%s5 + $0x1c] sm:$0xf] %vm464, %v439
  %473 = vst.msk [vmem:[%s5 + $0x20] sm:$0xf] %vm464, %v440
  %474 = vst.msk [vmem:[%s5 + $0x24] sm:$0xf] %vm464, %v441
  %475 = vst.msk [vmem:[%s5 + $0x28] sm:$0xf] %vm464, %v442
  %476 = vst.msk [vmem:[%s5 + $0x2c] sm:$0xf] %vm464, %v443
  %477 = vst.msk [vmem:[%s5 + $0x30] sm:$0xf] %vm464, %v444
  %478 = vst.msk [vmem:[%s5 + $0x34] sm:$0xf] %vm464, %v445
  %479 = vst.msk [vmem:[%s5 + $0x38] sm:$0xf] %vm464, %v446
  %480 = vst.msk [vmem:[%s5 + $0x3c] sm:$0xf] %vm464, %v447
  %v481 = vpack.c.bf16 %v393, %v392
  %v482 = vpack.c.bf16 %v395, %v394
  %v483 = vpack.c.bf16 %v397, %v396
  %v484 = vpack.c.bf16 %v399, %v398
  %v485 = vpack.c.bf16 %v401, %v400
  %v486 = vpack.c.bf16 %v403, %v402
  %v487 = vpack.c.bf16 %v405, %v404
  %v488 = vpack.c.bf16 %v407, %v406
  %v497 = vunpack.c.l.b16 %v481
  %v498 = vunpack.c.h.b16 %v481
  %v499 = vunpack.c.l.b16 %v482
  %v500 = vunpack.c.h.b16 %v482
  %v501 = vunpack.c.l.b16 %v483
  %v502 = vunpack.c.h.b16 %v483
  %v503 = vunpack.c.l.b16 %v484
  %v504 = vunpack.c.h.b16 %v484
  %v505 = vunpack.c.l.b16 %v485
  %v506 = vunpack.c.h.b16 %v485
  %v507 = vunpack.c.l.b16 %v486
  %v508 = vunpack.c.h.b16 %v486
  %v509 = vunpack.c.l.b16 %v487
  %v510 = vunpack.c.h.b16 %v487
  %v511 = vunpack.c.l.b16 %v488
  %v512 = vunpack.c.h.b16 %v488
  %v513 = vpack.c.b16 %v497, %v497
  %v514 = vpack.c.b16 %v498, %v498
  %v515 = vpack.c.b16 %v499, %v499
  %v516 = vpack.c.b16 %v500, %v500
  %v517 = vpack.c.b16 %v501, %v501
  %v518 = vpack.c.b16 %v502, %v502
  %v519 = vpack.c.b16 %v503, %v503
  %v520 = vpack.c.b16 %v504, %v504
  %v521 = vpack.c.b16 %v505, %v505
  %v522 = vpack.c.b16 %v506, %v506
  %v523 = vpack.c.b16 %v507, %v507
  %v524 = vpack.c.b16 %v508, %v508
  %v525 = vpack.c.b16 %v509, %v509
  %v526 = vpack.c.b16 %v510, %v510
  %v527 = vpack.c.b16 %v511, %v511
  %v528 = vpack.c.b16 %v512, %v512
  %vm545 = vcmask 125952
  %546 = vst.msk [vmem:[%s6] sm:$0xf] %vm545, %v513
  %547 = vst.msk [vmem:[%s6 + $0x4] sm:$0xf] %vm545, %v514
  %548 = vst.msk [vmem:[%s6 + $0x8] sm:$0xf] %vm545, %v515
  %549 = vst.msk [vmem:[%s6 + $0xc] sm:$0xf] %vm545, %v516
  %550 = vst.msk [vmem:[%s6 + $0x10] sm:$0xf] %vm545, %v517
  %551 = vst.msk [vmem:[%s6 + $0x14] sm:$0xf] %vm545, %v518
  %552 = vst.msk [vmem:[%s6 + $0x18] sm:$0xf] %vm545, %v519
  %553 = vst.msk [vmem:[%s6 + $0x1c] sm:$0xf] %vm545, %v520
  %554 = vst.msk [vmem:[%s6 + $0x20] sm:$0xf] %vm545, %v521
  %555 = vst.msk [vmem:[%s6 + $0x24] sm:$0xf] %vm545, %v522
  %556 = vst.msk [vmem:[%s6 + $0x28] sm:$0xf] %vm545, %v523
  %557 = vst.msk [vmem:[%s6 + $0x2c] sm:$0xf] %vm545, %v524
  %558 = vst.msk [vmem:[%s6 + $0x30] sm:$0xf] %vm545, %v525
  %559 = vst.msk [vmem:[%s6 + $0x34] sm:$0xf] %vm545, %v526
  %560 = vst.msk [vmem:[%s6 + $0x38] sm:$0xf] %vm545, %v527
  %561 = vst.msk [vmem:[%s6 + $0x3c] sm:$0xf] %vm545, %v528
  // Predicated region
  $region22: #{stem_block_forward.2} parent=0 // pred_check
    _
  $region23: #{stem_block_forward.2} parent=0 // pred_check_branch
    %563 = sbr.rel (0) target = $region25
  $region24: #{stem_block_forward.2} parent=0 // pred_region
    _
  $region25: #{stem_block_forward.2} parent=0 // pred_fallthru
    _
  // Predicated region
  $region26: #{stem_block_forward.2} parent=0 // pred_check
    _
  $region27: #{stem_block_forward.2} parent=0 // pred_check_branch
    %565 = sbr.rel (0) target = $region29
  $region28: #{stem_block_forward.2} parent=0 // pred_region
    _
  $region29: #{stem_block_forward.2} parent=0 // pred_fallthru
    _
  // Predicated region
  $region30: #{stem_block_forward.2} parent=0 // pred_check
    _
  $region31: #{stem_block_forward.2} parent=0 // pred_check_branch
    %567 = sbr.rel (0) target = $region33
  $region32: #{stem_block_forward.2} parent=0 // pred_region
    _
  $region33: #{stem_block_forward.2} parent=0 // pred_fallthru
    _
  // Predicated region
  $region34: #{stem_block_forward.2} parent=0 // pred_check
    _
  $region35: #{stem_block_forward.2} parent=0 // pred_check_branch
    %569 = sbr.rel (0) target = $region37
  $region36: #{stem_block_forward.2} parent=0 // pred_region
    _
  $region37: #{stem_block_forward.2} parent=0 // pred_fallthru
    _

// kernel: stem_block_forward.3
$region0: #{stem_block_forward.3}
  #allocation0 [shape = 'u32[]', space=smem, size = 0x4, offset = 0x4, fixed_abs, tag = 'smem constant byte address 0x4 - core index']
  #allocation1 [shape = 'u32[144,128]{1,0:T(1,128)}', space=vmem, size = 0x12000, scoped, tag = 'internal scratch']
  %s0 = inlined_call_operand.vmem [shape: bf16[32,144], index: 0, kind: input, shape index: {}]
  %s1 = inlined_call_operand.vmem [shape: bf16[32,128], index: 1, kind: input, shape index: {}]
  %s2 = inlined_call_operand.vmem [shape: bf16[144,32], index: 2, kind: input, shape index: {}]
  %s3 = inlined_call_operand.vmem [shape: f32[1,32], index: 3, kind: input, shape index: {}]
  %s4 = inlined_call_operand.vmem [shape: bf16[32,32], index: 4, kind: input, shape index: {}]
  %s5 = inlined_call_operand.vmem [shape: bf16[32,32], index: 5, kind: input, shape index: {}]
  %s6 = inlined_call_operand.vmem [shape: f32[1,32], index: 6, kind: input, shape index: {}]
  %s7 = inlined_call_operand.hbm [shape: f32[32,32], index: 7, kind: output, shape index: {}]
  %s8 = sld [smem:[#allocation0]]
  $region38: #{stem_block_forward.3} parent=0
    _
  %s10 = ssub.s32 1, %s8
  %s11 = scalar_select 0, %s10, %s8
  $region1: #{stem_block_forward.3} parent=0
    #allocation2 [shape = 'u8[16384]{0}', space=vmem, size = 0x4000, scoped, tag = 'output window, operand 0, single buffered']
    #allocation3 [shape = 's32[1]{0}', space=sflag, size = 0x4, scoped, tag = 'scoped memory for stem_block_forward.3']
    %12 = vsyncpa [#allocation3], 0
    // Predicated region
    $region2: #{stem_block_forward.3} parent=1 // pred_check
      _
    $region3: #{stem_block_forward.3} parent=1 // pred_check_branch
      %14 = sbr.rel (0) target = $region5
    $region4: #{stem_block_forward.3} parent=1 // pred_region
      _
    $region5: #{stem_block_forward.3} parent=1 // pred_fallthru
      _
    // Predicated region
    $region6: #{stem_block_forward.3} parent=1 // pred_check
      _
    $region7: #{stem_block_forward.3} parent=1 // pred_check_branch
      %16 = sbr.rel (0) target = $region9
    $region8: #{stem_block_forward.3} parent=1 // pred_region
      _
    $region9: #{stem_block_forward.3} parent=1 // pred_fallthru
      _
    // Predicated region
    $region10: #{stem_block_forward.3} parent=1 // pred_check
      _
    $region11: #{stem_block_forward.3} parent=1 // pred_check_branch
      %18 = sbr.rel (0) target = $region13
    $region12: #{stem_block_forward.3} parent=1 // pred_region
      _
    $region13: #{stem_block_forward.3} parent=1 // pred_fallthru
      _
    // Predicated region
    $region14: #{stem_block_forward.3} parent=1 // pred_check
      _
    $region15: #{stem_block_forward.3} parent=1 // pred_check_branch
      %20 = sbr.rel (0) target = $region17
    $region16: #{stem_block_forward.3} parent=1 // pred_region
      _
    $region17: #{stem_block_forward.3} parent=1 // pred_fallthru
      _
    // Predicated region
    $region18: #{stem_block_forward.3} parent=1 // pred_check
      _
    $region19: #{stem_block_forward.3} parent=1 // pred_check_branch
      %22 = sbr.rel (0) target = $region21
    $region20: #{stem_block_forward.3} parent=1 // pred_region
      _
    $region21: #{stem_block_forward.3} parent=1 // pred_fallthru
      _
    // Predicated region
    $region22: #{stem_block_forward.3} parent=1 // pred_check
      _
    $region23: #{stem_block_forward.3} parent=1 // pred_check_branch
      %24 = sbr.rel (0) target = $region25
    $region24: #{stem_block_forward.3} parent=1 // pred_region
      _
    $region25: #{stem_block_forward.3} parent=1 // pred_fallthru
      _
    // Predicated region
    $region26: #{stem_block_forward.3} parent=1 // pred_check
      _
    $region27: #{stem_block_forward.3} parent=1 // pred_check_branch
      %26 = sbr.rel (0) target = $region29
    $region28: #{stem_block_forward.3} parent=1 // pred_region
      _
    $region29: #{stem_block_forward.3} parent=1 // pred_fallthru
      _
    %v28 = vld [vmem:[%s0] sm:$0xff]
    %v29 = vld [vmem:[%s0 + $0x8] sm:$0xff]
    %v30 = vld [vmem:[%s0 + $0x10] sm:$0xff]
    %v31 = vld [vmem:[%s0 + $0x18] sm:$0xff]
    %v32 = vld [vmem:[%s2] sm:$0xf]
    %v33 = vld [vmem:[%s2 + $0x4] sm:$0xf]
    %v34 = vld [vmem:[%s2 + $0x8] sm:$0xf]
    %v35 = vld [vmem:[%s2 + $0xc] sm:$0xf]
    %v36 = vld [vmem:[%s2 + $0x10] sm:$0xf]
    %v37 = vld [vmem:[%s2 + $0x14] sm:$0xf]
    %v38 = vld [vmem:[%s2 + $0x18] sm:$0xf]
    %v39 = vld [vmem:[%s2 + $0x1c] sm:$0xf]
    %v40 = vld [vmem:[%s2 + $0x20] sm:$0xf]
    %v41 = vld [vmem:[%s2 + $0x24] sm:$0xf]
    %v42 = vld [vmem:[%s2 + $0x28] sm:$0xf]
    %v43 = vld [vmem:[%s2 + $0x2c] sm:$0xf]
    %v44 = vld [vmem:[%s2 + $0x30] sm:$0xf]
    %v45 = vld [vmem:[%s2 + $0x34] sm:$0xf]
    %v46 = vld [vmem:[%s2 + $0x38] sm:$0xf]
    %v47 = vld [vmem:[%s2 + $0x3c] sm:$0xf]
    %v48 = vld [vmem:[%s2 + $0x40] sm:$0xf]
    %v49 = vld [vmem:[%s2 + $0x44] sm:$0xf]
    %v50 = vld [vmem:[%s3] sm:$0x1]
    %v52 = vlaneseq
    %v53 = vshrl.u32 %v52, 7
    %v54 = vsub.s32 0, %v53
    %v55 = vrot.slane %v50, %v54
    %v61 = vunpack.c.l.b16 %v28
    %v62 = vunpack.c.h.b16 %v28
    %v63 = vunpack.c.l.b16 %v29
    %v64 = vunpack.c.h.b16 %v29
    %v65 = vunpack.c.l.b16 %v30
    %v66 = vunpack.c.h.b16 %v30
    %v67 = vunpack.c.l.b16 %v31
    %v68 = vunpack.c.h.b16 %v31
    %v69 = vpack.c.b16 %v63, %v61
    %v70 = vpack.c.b16 %v64, %v62
    %v71 = vpack.c.b16 %v67, %v65
    %v72 = vpack.c.b16 %v68, %v66
    %v93 = vunpack.c.l.b16 %v32
    %v94 = vunpack.c.l.b16 %v33
    %v95 = vunpack.c.l.b16 %v34
    %v96 = vunpack.c.l.b16 %v35
    %v97 = vunpack.c.l.b16 %v36
    %v98 = vunpack.c.l.b16 %v37
    %v99 = vunpack.c.l.b16 %v38
    %v100 = vunpack.c.l.b16 %v39
    %v101 = vunpack.c.l.b16 %v40
    %v102 = vunpack.c.l.b16 %v41
    %v103 = vunpack.c.l.b16 %v42
    %v104 = vunpack.c.l.b16 %v43
    %v105 = vunpack.c.l.b16 %v44
    %v106 = vunpack.c.l.b16 %v45
    %v107 = vunpack.c.l.b16 %v46
    %v108 = vunpack.c.l.b16 %v47
    %v109 = vunpack.c.l.b16 %v48
    %v110 = vunpack.c.l.b16 %v49
    %v111 = vpack.c.b16 %v94, %v93
    %v112 = vpack.c.b16 %v96, %v95
    %v113 = vpack.c.b16 %v98, %v97
    %v114 = vpack.c.b16 %v100, %v99
    %v115 = vpack.c.b16 %v102, %v101
    %v116 = vpack.c.b16 %v104, %v103
    %v117 = vpack.c.b16 %v106, %v105
    %v118 = vpack.c.b16 %v108, %v107
    %v119 = vpack.c.b16 %v110, %v109
    %vm129 = vcmask 130048
    %v131 = vsel %vm129, %v70, 0
    %v134 = vsel %vm129, %v72, 0
    %136 = vmatprep.subr.bf16.mxu0 0
    %137 = vmatpush1.bf16.msra.mxu0 %v118
    %138 = vmatprep.subr.bf16.mxu0 0
    %139 = vmatpush1.bf16.msra.mxu0 %v117
    %140 = vmatprep.subr.bf16.mxu0 0
    %141 = vmatpush1.bf16.msra.mxu0 %v116
    %142 = vmatprep.subr.bf16.mxu0 0
    %143 = vmatpush1.bf16.msra.mxu0 %v115
    %144 = vmatprep.subr.bf16.mxu0 0
    %145 = vmatpush1.bf16.msra.mxu0 %v114
    %146 = vmatprep.subr.bf16.mxu0 0
    %147 = vmatpush1.bf16.msra.mxu0 %v113
    %148 = vmatprep.subr.bf16.mxu0 0
    %149 = vmatpush1.bf16.msra.mxu0 %v112
    %150 = vmatprep.subr.bf16.mxu0 0
    %151 = vmatpush1.bf16.msra.mxu0 %v111
    %152 = vmatprep.subr.bf16.mxu0 0
    %153 = vmatpush2.bf16.msra.mxu0 0
    %154 = vmatprep.subr.bf16.mxu0 0
    %155 = vmatpush2.bf16.msra.mxu0 0
    %156 = vmatprep.subr.bf16.mxu0 0
    %157 = vmatpush2.bf16.msra.mxu0 0
    %158 = vmatprep.subr.bf16.mxu0 0
    %159 = vmatpush2.bf16.msra.mxu0 0
    %160 = vmatprep.subr.bf16.mxu0 0
    %161 = vmatpush2.bf16.msra.mxu0 0
    %162 = vmatprep.subr.bf16.mxu0 0
    %163 = vmatpush2.bf16.msra.mxu0 0
    %164 = vmatprep.subr.bf16.mxu0 0
    %165 = vmatpush2.bf16.msra.mxu0 0
    %166 = vmatprep.subr.bf16.mxu0 0
    %167 = vmatpush2.bf16.msra.mxu0 %v119
    %168 = vmatprep.mubr.bf16.mxu0 %v131
    %169 = vmatmul.mubr.bf16.gmra.mxu0 %v69
    %v170 = vpop.f32.mrf.mxu0
    %v171 = vadd.f32 %v55, %v170
    %v172 = vpop.f32.mrf.mxu0
    %v173 = vpop.f32.mrf.mxu0
    %v174 = vadd.f32 %v55, %v173
    %v175 = vpop.f32.mrf.mxu0
    %176 = vmatprep.mubr.bf16.mxu0 %v134
    %177 = vmatmul.mubr.bf16.gmra.mxu0 %v71
    %v178 = vpop.f32.mrf.mxu0
    %v179 = vadd.f32 %v55, %v178
    %v180 = vpop.f32.mrf.mxu0
    %v181 = vpop.f32.mrf.mxu0
    %v182 = vadd.f32 %v55, %v181
    %v183 = vpop.f32.mrf.mxu0
    %184 = vdwg.mxu0
    %v185 = vmax.f32 %v171, 0.0
    %v186 = vmax.f32 %v174, 0.0
    %v187 = vmax.f32 %v179, 0.0
    %v188 = vmax.f32 %v182, 0.0
    %v189 = vld [vmem:[%s1] sm:$0xf]
    %v190 = vld [vmem:[%s1 + $0x4] sm:$0xf]
    %v191 = vld [vmem:[%s1 + $0x8] sm:$0xf]
    %v192 = vld [vmem:[%s1 + $0xc] sm:$0xf]
    %197 = vrot.lane.b32.xlu0 %v189, 96
    %v198 = vpop.permute.xlu0 %197
    %199 = vrot.lane.b32.xlu0 %v190, 96
    %v200 = vpop.permute.xlu0 %199
    %201 = vrot.lane.b32.xlu0 %v191, 96
    %v202 = vpop.permute.xlu0 %201
    %203 = vrot.lane.b32.xlu0 %v192, 96
    %v204 = vpop.permute.xlu0 %203
    %v209 = vmax.bf16 %v189, %v198
    %v210 = vmax.bf16 %v190, %v200
    %v211 = vmax.bf16 %v191, %v202
    %v212 = vmax.bf16 %v192, %v204
    %217 = vrot.lane.b32.xlu0 %v209, 64
    %v218 = vpop.permute.xlu0 %217
    %219 = vrot.lane.b32.xlu0 %v210, 64
    %v220 = vpop.permute.xlu0 %219
    %221 = vrot.lane.b32.xlu0 %v211, 64
    %v222 = vpop.permute.xlu0 %221
    %223 = vrot.lane.b32.xlu0 %v212, 64
    %v224 = vpop.permute.xlu0 %223
    %v229 = vmax.bf16 %v209, %v218
    %v230 = vmax.bf16 %v210, %v220
    %v231 = vmax.bf16 %v211, %v222
    %v232 = vmax.bf16 %v212, %v224
    %v233 = vpack.c.bf16 %v186, %v185
    %v234 = vpack.c.bf16 %v188, %v187
    %v235 = vld [vmem:[%s4] sm:$0xf]
    %v236 = vld [vmem:[%s4 + $0x4] sm:$0xf]
    %v237 = vld [vmem:[%s4 + $0x8] sm:$0xf]
    %v238 = vld [vmem:[%s4 + $0xc] sm:$0xf]
    %v239 = vld [vmem:[%s5] sm:$0xf]
    %v240 = vld [vmem:[%s5 + $0x4] sm:$0xf]
    %v241 = vld [vmem:[%s5 + $0x8] sm:$0xf]
    %v242 = vld [vmem:[%s5 + $0xc] sm:$0xf]
    %v247 = vunpack.c.l.b16 %v229
    %v248 = vunpack.c.l.b16 %v230
    %v249 = vunpack.c.l.b16 %v231
    %v250 = vunpack.c.l.b16 %v232
    %v251 = vpack.c.b16 %v248, %v247
    %v252 = vpack.c.b16 %v250, %v249
    %v257 = vunpack.c.l.b16 %v239
    %v258 = vunpack.c.l.b16 %v240
    %v259 = vunpack.c.l.b16 %v241
    %v260 = vunpack.c.l.b16 %v242
    %v261 = vpack.c.b16 %v258, %v257
    %v262 = vpack.c.b16 %v260, %v259
    %vm265 = vcmask 261120
    %v267 = vsel %vm265, %v251, 0
    %v270 = vsel %vm265, %v252, 0
    %272 = vmatprep.subr.bf16.mxu0 0
    %273 = vmatpush1.bf16.msra.mxu0 0
    %274 = vmatprep.subr.bf16.mxu0 0
    %275 = vmatpush1.bf16.msra.mxu0 0
    %276 = vmatprep.subr.bf16.mxu0 0
    %277 = vmatpush1.bf16.msra.mxu0 0
    %278 = vmatprep.subr.bf16.mxu0 0
    %279 = vmatpush1.bf16.msra.mxu0 0
    %280 = vmatprep.subr.bf16.mxu0 0
    %281 = vmatpush1.bf16.msra.mxu0 0
    %282 = vmatprep.subr.bf16.mxu0 0
    %283 = vmatpush1.bf16.msra.mxu0 0
    %284 = vmatprep.subr.bf16.mxu0 0
    %285 = vmatpush1.bf16.msra.mxu0 %v262
    %286 = vmatprep.subr.bf16.mxu0 0
    %287 = vmatpush1.bf16.msra.mxu0 %v261
    %288 = vmatprep.subr.bf16.mxu0 0
    %289 = vmatpush2.bf16.msra.mxu0 0
    %290 = vmatprep.subr.bf16.mxu0 0
    %291 = vmatpush2.bf16.msra.mxu0 0
    %292 = vmatprep.subr.bf16.mxu0 0
    %293 = vmatpush2.bf16.msra.mxu0 0
    %294 = vmatprep.subr.bf16.mxu0 0
    %295 = vmatpush2.bf16.msra.mxu0 0
    %296 = vmatprep.subr.bf16.mxu0 0
    %297 = vmatpush2.bf16.msra.mxu0 0
    %298 = vmatprep.subr.bf16.mxu0 0
    %299 = vmatpush2.bf16.msra.mxu0 0
    %300 = vmatprep.subr.bf16.mxu0 0
    %301 = vmatpush2.bf16.msra.mxu0 0
    %302 = vmatprep.subr.bf16.mxu0 0
    %303 = vmatpush2.bf16.msra.mxu0 0
    %304 = vmatprep.mubr.bf16.mxu0 0
    %305 = vmatmul.mubr.bf16.gmra.mxu0 %v267
    %v306 = vpop.f32.mrf.mxu0
    %v307 = vadd.f32 0.0, %v306
    %v308 = vpop.f32.mrf.mxu0
    %v309 = vpop.f32.mrf.mxu0
    %v310 = vadd.f32 0.0, %v309
    %v311 = vpop.f32.mrf.mxu0
    %312 = vmatprep.mubr.bf16.mxu0 0
    %313 = vmatmul.mubr.bf16.gmra.mxu0 %v270
    %v314 = vpop.f32.mrf.mxu0
    %v315 = vadd.f32 0.0, %v314
    %v316 = vpop.f32.mrf.mxu0
    %v317 = vpop.f32.mrf.mxu0
    %v318 = vadd.f32 0.0, %v317
    %v319 = vpop.f32.mrf.mxu0
    %320 = vdwg.mxu0
    %v325 = vunpack.c.l.b16 %v235
    %v326 = vunpack.c.l.b16 %v236
    %v327 = vunpack.c.l.b16 %v237
    %v328 = vunpack.c.l.b16 %v238
    %v329 = vpack.c.b16 %v326, %v325
    %v330 = vpack.c.b16 %v328, %v327
    %v334 = vsel %vm265, %v233, 0
    %v337 = vsel %vm265, %v234, 0
    %339 = vmatprep.subr.bf16.mxu0 0
    %340 = vmatpush1.bf16.msra.mxu0 0
    %341 = vmatprep.subr.bf16.mxu0 0
    %342 = vmatpush1.bf16.msra.mxu0 0
    %343 = vmatprep.subr.bf16.mxu0 0
    %344 = vmatpush1.bf16.msra.mxu0 0
    %345 = vmatprep.subr.bf16.mxu0 0
    %346 = vmatpush1.bf16.msra.mxu0 0
    %347 = vmatprep.subr.bf16.mxu0 0
    %348 = vmatpush1.bf16.msra.mxu0 0
    %349 = vmatprep.subr.bf16.mxu0 0
    %350 = vmatpush1.bf16.msra.mxu0 0
    %351 = vmatprep.subr.bf16.mxu0 0
    %352 = vmatpush1.bf16.msra.mxu0 %v330
    %353 = vmatprep.subr.bf16.mxu0 0
    %354 = vmatpush1.bf16.msra.mxu0 %v329
    %355 = vmatprep.subr.bf16.mxu0 0
    %356 = vmatpush2.bf16.msra.mxu0 0
    %357 = vmatprep.subr.bf16.mxu0 0
    %358 = vmatpush2.bf16.msra.mxu0 0
    %359 = vmatprep.subr.bf16.mxu0 0
    %360 = vmatpush2.bf16.msra.mxu0 0
    %361 = vmatprep.subr.bf16.mxu0 0
    %362 = vmatpush2.bf16.msra.mxu0 0
    %363 = vmatprep.subr.bf16.mxu0 0
    %364 = vmatpush2.bf16.msra.mxu0 0
    %365 = vmatprep.subr.bf16.mxu0 0
    %366 = vmatpush2.bf16.msra.mxu0 0
    %367 = vmatprep.subr.bf16.mxu0 0
    %368 = vmatpush2.bf16.msra.mxu0 0
    %369 = vmatprep.subr.bf16.mxu0 0
    %370 = vmatpush2.bf16.msra.mxu0 0
    %371 = vmatprep.mubr.bf16.mxu0 0
    %372 = vmatmul.mubr.bf16.gmra.mxu0 %v334
    %v373 = vpop.f32.mrf.mxu0
    %v374 = vadd.f32 %v307, %v373
    %v375 = vpop.f32.mrf.mxu0
    %v376 = vpop.f32.mrf.mxu0
    %v377 = vadd.f32 %v310, %v376
    %v378 = vpop.f32.mrf.mxu0
    %379 = vmatprep.mubr.bf16.mxu0 0
    %380 = vmatmul.mubr.bf16.gmra.mxu0 %v337
    %v381 = vpop.f32.mrf.mxu0
    %v382 = vadd.f32 %v315, %v381
    %v383 = vpop.f32.mrf.mxu0
    %v384 = vpop.f32.mrf.mxu0
    %v385 = vadd.f32 %v318, %v384
    %v386 = vpop.f32.mrf.mxu0
    %387 = vdwg.mxu0
    %v388 = vld [vmem:[%s6] sm:$0x1]
    %v390 = vlaneseq
    %v391 = vshrl.u32 %v390, 7
    %v392 = vsub.s32 0, %v391
    %v393 = vrot.slane %v388, %v392
    %v395 = vadd.f32 %v374, %v393
    %v396 = vadd.f32 %v377, %v393
    %v397 = vadd.f32 %v382, %v393
    %v398 = vadd.f32 %v385, %v393
    %v399 = vmax.f32 %v395, 0.0
    %v400 = vmax.f32 %v396, 0.0
    %v401 = vmax.f32 %v397, 0.0
    %v402 = vmax.f32 %v398, 0.0
    %403 = vst.msk [vmem:[#allocation2] sm:$0xff] %vm265, %v399
    %404 = vst.msk [vmem:[#allocation2 + $0x8] sm:$0xff] %vm265, %v400
    %405 = vst.msk [vmem:[#allocation2 + $0x10] sm:$0xff] %vm265, %v401
    %406 = vst.msk [vmem:[#allocation2 + $0x18] sm:$0xff] %vm265, %v402
    // Predicated region
    $region30: #{stem_block_forward.3} parent=1 // pred_check
      _
    $region31: #{stem_block_forward.3} parent=1 // pred_check_branch
      %408 = sbr.rel (0) target = $region33
    $region32: #{stem_block_forward.3} parent=1 // pred_region
      %s410 = ssub.s32 512, 512
      %411 = vsyncadd [#allocation3], %s410
      %s412 = sshll.u32 [#allocation2], 4
      %s413 = int_to_ptr.vmem [resolvable:$true] %s412
      %418 = dma.vmem_to_hbm [thread:$0]  %s413, 512, %s7, [#allocation3], 128, 128, 8
    $region33: #{stem_block_forward.3} parent=1 // pred_fallthru
      _
    // Predicated region
    $region34: #{stem_block_forward.3} parent=1 // pred_check
      _
    $region35: #{stem_block_forward.3} parent=1 // pred_check_branch
      %420 = sbr.rel (0) target = $region37
    $region36: #{stem_block_forward.3} parent=1 // pred_region
      %421 = dma.done [#allocation3], 512
    $region37: #{stem_block_forward.3} parent=1 // pred_fallthru
      _
    %422 = vsyncpa [#allocation3], 1

</llo_original>
